<compile_context>
chip_gen: v7x
topology: tpu7x:2x2x1
jax: 0.10.0
libtpu: 0.0.40
codegen_flags: <defaults>
</compile_context>

<pallas_src>
import functools

import jax
import jax.numpy as jnp
from jax.experimental import pallas as pl
from jax.experimental.pallas import tpu as pltpu


def _tv_kernel(x_ref, o_ref, carry_ref, *,
               c, h_total, tile_h, do_dx, do_dy_local, do_carry, mask_rows):
    # x_ref    : (tile_h, W*C) input row tile (lane-dense)
    # o_ref    : (1, 1) f32 running TV sum (resident across grid)
    # carry_ref: (1, W*C) f32 last row of the previous tile
    r = pl.program_id(0)

    @pl.when(r == 0)
    def _():
        o_ref[...] = jnp.zeros_like(o_ref)

    x = x_ref[...].astype(jnp.float32)                      # (tile_h, W*C)

    if mask_rows:  # last tile may extend past H; zero the out-of-range rows
        row_idx = r * tile_h + jax.lax.broadcasted_iota(jnp.int32, (tile_h, 1), 0)
        row_valid = row_idx < h_total
        x = jnp.where(row_valid, x, 0.0)

    acc = jnp.zeros((1, 1), jnp.float32)

    if do_dx:      # horizontal diffs: lane shift by C inside the flat row
        dx = jnp.abs(x[:, c:] - x[:, :-c])
        acc = acc + jnp.sum(dx, keepdims=True)

    if do_dy_local:  # vertical diffs within this tile
        dy = jnp.abs(x[1:, :] - x[:-1, :])
        if mask_rows:
            # pair (i, i+1) only counts if row i+1 is a real image row
            dy = jnp.where(row_valid[1:], dy, 0.0)
        acc = acc + jnp.sum(dy, keepdims=True)

    o_ref[...] += acc

    if do_carry:   # vertical diff across the tile boundary
        @pl.when(r > 0)
        def _():
            db = jnp.abs(x[0:1, :] - carry_ref[...])
            o_ref[...] += jnp.sum(db, keepdims=True)

        carry_ref[...] = x[tile_h - 1:tile_h, :]


def total_variation_loss(output_image, *, block_rows=None):
    """Total variation loss for a (H, W, C) tensor; matches the PyTorch module."""
    if output_image.ndim != 3:
        raise ValueError("Expected input to be a 3D tensor of shape (h, w, c)")
    h, w, c = output_image.shape
    wc = w * c
    x2 = output_image.reshape(h, wc)          # lane-dense 2-D view, channels fastest

    if block_rows is None:
        # ~2 MiB lane-dense blocks (multiple of 8 rows), or the whole image if small.
        itemsize = jnp.dtype(x2.dtype).itemsize
        rows = max(1, (2 * 1024 * 1024) // max(wc * itemsize, 1))
        block_rows = h if rows >= h else max(8, (rows // 8) * 8)
    assert block_rows == h or block_rows % 8 == 0, block_rows
    grid_n = pl.cdiv(h, block_rows)

    kernel = functools.partial(
        _tv_kernel,
        c=c,
        h_total=h,
        tile_h=block_rows,
        do_dx=(w > 1),
        do_dy_local=(block_rows > 1),
        do_carry=(grid_n > 1),
        mask_rows=(h % block_rows != 0),
    )

    out = pl.pallas_call(
        kernel,
        out_shape=jax.ShapeDtypeStruct((1, 1), jnp.float32),
        grid_spec=pltpu.PrefetchScalarGridSpec(
            num_scalar_prefetch=0,
            grid=(grid_n,),
            in_specs=[pl.BlockSpec((block_rows, wc), lambda i: (i, 0))],
            out_specs=pl.BlockSpec((1, 1), lambda i: (0, 0)),
            scratch_shapes=[pltpu.VMEM((1, wc), jnp.float32)],
        ),
        # Row carry + scalar accumulation -> sequential ("arbitrary") grid axis.
        # Default scoped-VMEM limit is plenty (blocks are <= ~2 MiB double-buffered),
        # so no vmem_limit_bytes request (keeps headroom on v7x's 64 MiB).
        compiler_params=pltpu.CompilerParams(
            dimension_semantics=("arbitrary",),
        ),
    )(x2)
    return out[0, 0]


def _tv_ref(x):
    return (jnp.sum(jnp.abs(x[:, 1:, :] - x[:, :-1, :]))
            + jnp.sum(jnp.abs(x[1:, :, :] - x[:-1, :, :])))


if __name__ == "__main__":
    key = jax.random.PRNGKey(0)
    k1, k2 = jax.random.split(key)

    # Primary example: small (h, w, c) image as the module expects.
    img = jax.random.uniform(k1, (16, 16, 4), dtype=jnp.float32)
    tv = jax.jit(total_variation_loss)(img)
    jax.block_until_ready(tv)
    assert tv.shape == () and bool(jnp.isfinite(tv))
    assert jnp.allclose(tv, _tv_ref(img), rtol=1e-5, atol=1e-4), (tv, _tv_ref(img))

    # Second case exercises the multi-tile path (row carry + partial-tile masking).
    img2 = jax.random.uniform(k2, (50, 24, 3), dtype=jnp.float32)
    tv2 = jax.jit(functools.partial(total_variation_loss, block_rows=8))(img2)
    jax.block_until_ready(tv2)
    assert jnp.allclose(tv2, _tv_ref(img2), rtol=1e-5, atol=1e-4), (tv2, _tv_ref(img2))

    print("KERNEL_OK")
</pallas_src>

<mosaic_0001>
module attributes {stable_mosaic.version = 11 : i64} {
  func.func @_tv_kernel(%arg0: i32, %arg1: memref<16x64xf32, #tpu.memory_space<vmem>>, %arg2: memref<1x1xf32, #tpu.memory_space<vmem>>, %arg3: memref<1x64xf32, #tpu.memory_space<vmem>>) attributes {dimension_semantics = [#tpu.dimension_semantics<arbitrary>], iteration_bounds = array<i64: 1>, scalar_prefetch = 0 : i64, scratch_operands = 1 : i64, tpu.core_type = #tpu.core_type<tc>, window_params = [{transform_indices = @transform_0, window_bounds = array<i64: 16, 64>}, {pipeline_mode = #tpu.pipeline_mode<synchronous>, transform_indices = @transform_1, window_bounds = array<i64: 1, 1>}]} {
    %c0_i32 = arith.constant 0 : i32
    %0 = arith.cmpi eq, %arg0, %c0_i32 : i32
    %1 = arith.extui %0 : i1 to i32
    %c0_i32_0 = arith.constant 0 : i32
    %2 = arith.cmpi ne, %1, %c0_i32_0 : i32
    scf.if %2 {
      %cst_8 = arith.constant 0.000000e+00 : f32
      %28 = vector.broadcast %cst_8 : f32 to vector<1x1xf32>
      %c0_9 = arith.constant 0 : index
      %c0_10 = arith.constant 0 : index
      %29 = vector.load %arg2[%c0_9, %c0_10] : memref<1x1xf32, #tpu.memory_space<vmem>>, vector<1x1xf32>
      tpu.vector_store %arg2[%c0_9, %c0_10], %28 {strides = array<i32>} : memref<1x1xf32, #tpu.memory_space<vmem>>, vector<1x1xf32>,
    } else {
    }
    %c0 = arith.constant 0 : index
    %c0_1 = arith.constant 0 : index
    %3 = vector.load %arg1[%c0, %c0_1] : memref<16x64xf32, #tpu.memory_space<vmem>>, vector<16x64xf32>
    %cst = arith.constant 0.000000e+00 : f32
    %4 = vector.broadcast %cst : f32 to vector<1x1xf32>
    %5 = vector.extract_strided_slice %3 {offsets = [0, 4], sizes = [16, 60], strides = [1, 1]} : vector<16x64xf32> to vector<16x60xf32>
    %6 = vector.extract_strided_slice %3 {offsets = [0, 0], sizes = [16, 60], strides = [1, 1]} : vector<16x64xf32> to vector<16x60xf32>
    %7 = arith.subf %5, %6 : vector<16x60xf32>
    %8 = math.absf %7 : vector<16x60xf32>
    %9 = vector.shape_cast %8 : vector<16x60xf32> to vector<1x16x60xf32>
    %cst_2 = arith.constant dense<0.000000e+00> : vector<1xf32>
    %10 = vector.multi_reduction <add>, %9, %cst_2 [1, 2] : vector<1x16x60xf32> to vector<1xf32>
    %11 = vector.shape_cast %10 : vector<1xf32> to vector<1x1x1xf32>
    %12 = vector.extract %11[0, 0, 0] : f32 from vector<1x1x1xf32>
    %13 = vector.broadcast %12 : f32 to vector<1x1xf32>
    %14 = arith.addf %4, %13 : vector<1x1xf32>
    %15 = vector.extract_strided_slice %3 {offsets = [1, 0], sizes = [15, 64], strides = [1, 1]} : vector<16x64xf32> to vector<15x64xf32>
    %16 = vector.extract_strided_slice %3 {offsets = [0, 0], sizes = [15, 64], strides = [1, 1]} : vector<16x64xf32> to vector<15x64xf32>
    %17 = arith.subf %15, %16 : vector<15x64xf32>
    %18 = math.absf %17 : vector<15x64xf32>
    %19 = vector.shape_cast %18 : vector<15x64xf32> to vector<1x15x64xf32>
    %cst_3 = arith.constant dense<0.000000e+00> : vector<1xf32>
    %20 = vector.multi_reduction <add>, %19, %cst_3 [1, 2] : vector<1x15x64xf32> to vector<1xf32>
    %21 = vector.shape_cast %20 : vector<1xf32> to vector<1x1x1xf32>
    %22 = vector.extract %21[0, 0, 0] : f32 from vector<1x1x1xf32>
    %23 = vector.broadcast %22 : f32 to vector<1x1xf32>
    %24 = arith.addf %14, %23 : vector<1x1xf32>
    %c0_4 = arith.constant 0 : index
    %c0_5 = arith.constant 0 : index
    %25 = vector.load %arg2[%c0_4, %c0_5] : memref<1x1xf32, #tpu.memory_space<vmem>>, vector<1x1xf32>
    %26 = arith.addf %25, %24 : vector<1x1xf32>
    %c0_6 = arith.constant 0 : index
    %c0_7 = arith.constant 0 : index
    %27 = vector.load %arg2[%c0_6, %c0_7] : memref<1x1xf32, #tpu.memory_space<vmem>>, vector<1x1xf32>
    tpu.vector_store %arg2[%c0_6, %c0_7], %26 {strides = array<i32>} : memref<1x1xf32, #tpu.memory_space<vmem>>, vector<1x1xf32>,
    return
  }
  func.func @transform_0(%arg0: i32) -> (i32, i32) {
    %c0_i32 = arith.constant 0 : i32
    %c0_i32_0 = arith.constant 0 : i32
    return %arg0, %c0_i32 : i32, i32
  }
  func.func @transform_1(%arg0: i32) -> (i32, i32) {
    %c0_i32 = arith.constant 0 : i32
    %c0_i32_0 = arith.constant 0 : i32
    %c0_i32_1 = arith.constant 0 : i32
    return %c0_i32, %c0_i32_0 : i32, i32
  }
}

</mosaic_0001>

<llo_original>
// kernel: total_variation_loss.1
$region0: #{total_variation_loss.1}
  #allocation0 [shape = 'u32[]', space=smem, size = 0x4, offset = 0x4, fixed_abs, tag = 'smem constant byte address 0x4 - core index']
  #allocation1 [shape = 'u32[144,128]{1,0:T(1,128)}', space=vmem, size = 0x12000, scoped, tag = 'internal scratch']
  #allocation2 [shape = 'f32[1,64]{1,0:T(1,128)}', space=vmem, size = 0x200, scoped, tag = 'scratch operand']
  %s0 = inlined_call_operand.vmem [shape: f32[16,64], index: 0, kind: input, shape index: {}]
  %s1 = inlined_call_operand.hbm [shape: f32[1,1], index: 1, kind: output, shape index: {}]
  %s2 = sld [smem:[#allocation0]]
  $region18: #{total_variation_loss.1} parent=0
    _
  %s4 = ssub.s32 1, %s2
  %s5 = scalar_select 0, %s4, %s2
  $region1: #{total_variation_loss.1} parent=0
    #allocation3 [shape = 'u8[512]{0}', space=vmem, size = 0x400, scoped, tag = 'output window, operand 0, single buffered']
    #allocation4 [shape = 's32[1]{0}', space=sflag, size = 0x4, scoped, tag = 'scoped memory for total_variation_loss.1']
    %6 = vsyncpa [#allocation4], 0
    // Predicated region
    $region2: #{total_variation_loss.1} parent=1 // pred_check
      _
    $region3: #{total_variation_loss.1} parent=1 // pred_check_branch
      %8 = sbr.rel (0) target = $region5
    $region4: #{total_variation_loss.1} parent=1 // pred_region
      _
    $region5: #{total_variation_loss.1} parent=1 // pred_fallthru
      _
    %p9 = scmp.eq.s32.totalorder 0, 0
    // Predicated region
    $region6: #{total_variation_loss.1} parent=1 // pred_check
      %p10 = pneg %p9
    $region7: #{total_variation_loss.1} parent=1 // pred_check_branch
      %12 = sbr.rel (%p10) target = $region9
    $region8: #{total_variation_loss.1} parent=1 // pred_region
      %vm13 = vcmask 0
      %14 = vst.msk [vmem:[#allocation3] sm:$0x1] %vm13, 0.0
    $region9: #{total_variation_loss.1} parent=1 // pred_fallthru
      _
    %v15 = vld [vmem:[%s0] sm:$0xff]
    %v16 = vld [vmem:[%s0 + $0x8] sm:$0xff]
    %19 = vrot.lane.b32.xlu0 %v15, 4
    %v20 = vpop.permute.xlu0 %19
    %21 = vrot.lane.b32.xlu0 %v16, 4
    %v22 = vpop.permute.xlu0 %21
    %v25 = vsub.f32 %v15, %v20
    %v26 = vsub.f32 %v16, %v22
    %v27 = vand.u32 2147483647, %v25
    %v28 = vand.u32 2147483647, %v26
    %31 = vrot.lane.b32.xlu0 %v27, 124
    %v32 = vpop.permute.xlu0 %31
    %33 = vrot.lane.b32.xlu0 %v28, 124
    %v34 = vpop.permute.xlu0 %33
    %vm37 = vcmask 490496
    %v38 = vsel %vm37, %v32, 0.0
    %v39 = vsel %vm37, %v34, 0.0
    %v40 = vadd.f32 %v38, %v39
    %41 = vadd.xlane.f32.xlu0 %v40
    %v42 = vpop.xlane.xlu0 %41
    %v43 = vrot.slane %v42, 4
    %v44 = vadd.f32 %v42, %v43
    %v45 = vrot.slane %v44, 2
    %v46 = vadd.f32 %v44, %v45
    %v47 = vrot.slane %v46, 1
    %v48 = vadd.f32 %v46, %v47
    %s49 = vtos %v48
    %v50 = vstv %s49
    %v51 = vadd.f32 %v50, 0.0
    %vm52 = vcmask 1040384
    %v53 = vrot.slane %v15, 7
    %v54 = vrot.slane %v16, 7
    %v55 = vsel %vm52, %v53, %v54
    %v58 = vsub.f32 %v15, %v53
    %v59 = vsub.f32 %v16, %v55
    %v60 = vand.u32 2147483647, %v58
    %v61 = vand.u32 2147483647, %v59
    %vm64 = vcmask 1046528
    %v65 = vrot.slane %v60, 1
    %v66 = vrot.slane %v61, 1
    %v67 = vsel %vm64, %v65, %v66
    %vm70 = vcmask 523264
    %v71 = vsel %vm70, %v67, 0.0
    %vm72 = vcmask 522240
    %v73 = vsel %vm72, %v66, 0.0
    %v74 = vadd.f32 %v71, %v73
    %75 = vadd.xlane.f32.xlu0 %v74
    %v76 = vpop.xlane.xlu0 %75
    %v77 = vrot.slane %v76, 4
    %v78 = vadd.f32 %v76, %v77
    %v79 = vrot.slane %v78, 2
    %v80 = vadd.f32 %v78, %v79
    %v81 = vrot.slane %v80, 1
    %v82 = vadd.f32 %v80, %v81
    %s83 = vtos %v82
    %v84 = vstv %s83
    %v85 = vadd.f32 %v51, %v84
    %v86 = vld [vmem:[#allocation3] sm:$0x1]
    %v87 = vadd.f32 %v86, %v85
    %vm88 = vcmask 0
    %89 = vst.msk [vmem:[#allocation3] sm:$0x1] %vm88, %v87
    // Predicated region
    $region10: #{total_variation_loss.1} parent=1 // pred_check
      _
    $region11: #{total_variation_loss.1} parent=1 // pred_check_branch
      %91 = sbr.rel (0) target = $region13
    $region12: #{total_variation_loss.1} parent=1 // pred_region
      %s93 = ssub.s32 16, 16
      %94 = vsyncadd [#allocation4], %s93
      %s96 = sshll.u32 [#allocation3], 4
      %s97 = int_to_ptr.vmem [resolvable:$true] %s96
      %99 = dma.vmem_to_hbm [thread:$0]  %s97, 16, %s1, [#allocation4]
    $region13: #{total_variation_loss.1} parent=1 // pred_fallthru
      _
    // Predicated region
    $region14: #{total_variation_loss.1} parent=1 // pred_check
      _
    $region15: #{total_variation_loss.1} parent=1 // pred_check_branch
      %101 = sbr.rel (0) target = $region17
    $region16: #{total_variation_loss.1} parent=1 // pred_region
      %102 = dma.done [#allocation4], 16
    $region17: #{total_variation_loss.1} parent=1 // pred_fallthru
      _
    %103 = vsyncpa [#allocation4], 1

</llo_original>
